<compile_context>
chip_gen: v6e
topology: v6e:2x2x1
jax: 0.10.0
libtpu: 0.0.40
codegen_flags: <defaults>
</compile_context>

<pallas_src>
import numpy as np
import jax
import jax.numpy as jnp
from jax import lax
from jax.experimental import pallas as pl
from jax.experimental.pallas import tpu as pltpu

EPS = 1e-5  # nn.BatchNorm2d default eps


# ----------------------------------------------------------------------------
# Pallas kernel: fused Conv2d + MaxPool2d(2,2) on one lane-dense pixel tile
# ----------------------------------------------------------------------------
def _conv_pool_kernel(p_ref, w_ref, b_ref, y_ref):
    """One tile of fused conv + 2x2 max-pool.

    p_ref : ((K+1)^2*Cin, TILE) bf16  window patches, pooled-pixel columns on lanes
    w_ref : (4*Cout, (K+1)^2*Cin) bf16  pool-group-stacked conv weights
    b_ref : (Cout, 1)             f32   conv bias (shared across the pool window)
    y_ref : (Cout, TILE)          bf16  conv+pool output tile (lane-dense store)
    """
    # Single MXU matmul: all 4 pool positions at once (stacked along the M dim).
    y = jnp.dot(w_ref[...], p_ref[...], preferred_element_type=jnp.float32)
    cout = y_ref.shape[0]
    # Max over the 4 pool groups: sublane-aligned f32 slices, pure VPU work.
    g0 = y[0 * cout:1 * cout, :]
    g1 = y[1 * cout:2 * cout, :]
    g2 = y[2 * cout:3 * cout, :]
    g3 = y[3 * cout:4 * cout, :]
    pooled = jnp.maximum(jnp.maximum(g0, g1), jnp.maximum(g2, g3)) + b_ref[...]
    y_ref[...] = pooled.astype(y_ref.dtype)


# ----------------------------------------------------------------------------
# Wrapper + XLA glue
# ----------------------------------------------------------------------------
def _pick_tile(m):
    """Largest pixel tile dividing m, preferring >=4 grid steps (2 per v7x core)."""
    sizes = (2048, 1024, 512, 256, 128)
    for min_steps in (4, 2, 1):
        for t in sizes:
            if m % t == 0 and m // t >= min_steps:
                return t
    return 128


def _window_patches(x_nchw, ksize, pad):
    """(K+1)x(K+1) padded-input window per pooled output pixel.

    Returns ((K+1)^2*Cin, M) with row order (u, v, cin), cin fastest, and column order
    (n, ho2, wo2).  M = N*Ho2*Wo2.  No pool-group duplication (the group selection lives
    in the weights), so this is only a (K+1)^2/4-x blow-up of the raw activation.
    """
    N, Cin, H, W = x_nchw.shape
    xp = jnp.pad(x_nchw, ((0, 0), (0, 0), (pad, pad), (pad, pad)))
    Ho = H + 2 * pad - ksize + 1
    Wo = W + 2 * pad - ksize + 1
    Ho2, Wo2 = Ho // 2, Wo // 2
    M = N * Ho2 * Wo2
    win = ksize + 1
    taps = []
    for u in range(win):
        for v in range(win):
            sl = xp[:, :, u:u + 2 * Ho2 - 1:2, v:v + 2 * Wo2 - 1:2]   # (N,Cin,Ho2,Wo2)
            taps.append(jnp.transpose(sl, (1, 0, 2, 3)).reshape(Cin, M))
    return jnp.concatenate(taps, axis=0), (N, Ho2, Wo2)               # (win^2*Cin, M)


def _stack_pool_group_weights(w):
    """Fold the 4 pool positions into the weights: ((2*2)*Cout, (K+1)^2*Cin)."""
    ksize, _, cin, cout = w.shape
    w_t = jnp.transpose(w, (3, 0, 1, 2))                              # (Cout,K,K,Cin)
    groups = []
    for a in range(2):
        for b in range(2):
            wg = jnp.pad(w_t, ((0, 0), (a, 1 - a), (b, 1 - b), (0, 0)))
            groups.append(wg.reshape(cout, (ksize + 1) * (ksize + 1) * cin))
    return jnp.concatenate(groups, axis=0)                            # (4*Cout, win^2*Cin)


def conv_pool_prelu(x_nchw, params, padding):
    """ConvPoolPRelu forward.  Input/output are NCHW like the PyTorch module."""
    w, b, gamma, beta, alpha = params
    ksize, _, cin, cout = w.shape

    # Wrapper-side (XLA) layout plumbing: pooled-window patches + group-stacked weights.
    patch, (N, Ho2, Wo2) = _window_patches(x_nchw, ksize, padding)
    kkc4 = (ksize + 1) * (ksize + 1) * cin
    M = N * Ho2 * Wo2
    M_pad = ((M + 127) // 128) * 128                                  # lane-dense stores
    if M_pad != M:
        patch = jnp.pad(patch, ((0, 0), (0, M_pad - M)))
    patch = patch.astype(jnp.bfloat16)
    w4 = _stack_pool_group_weights(w).astype(jnp.bfloat16)            # (4*Cout, kkc4)
    b2 = b.reshape(cout, 1).astype(jnp.float32)

    TILE = _pick_tile(M_pad)
    n_tiles = M_pad // TILE

    # Fused conv + 2x2 maxpool, tiled over pooled pixels (parallel -> both TCs on v7x).
    y = pl.pallas_call(
        _conv_pool_kernel,
        out_shape=jax.ShapeDtypeStruct((cout, M_pad), jnp.bfloat16),
        grid=(n_tiles,),
        in_specs=[pl.BlockSpec((kkc4, TILE), lambda i: (0, i)),
                  pl.BlockSpec((4 * cout, kkc4), lambda i: (0, 0)),
                  pl.BlockSpec((cout, 1), lambda i: (0, 0))],
        out_specs=pl.BlockSpec((cout, TILE), lambda i: (0, i)),
        compiler_params=pltpu.CompilerParams(
            dimension_semantics=("parallel",),
            vmem_limit_bytes=32 * 1024 * 1024),
    )(patch, w4, b2)

    # XLA glue (fuses with the final transpose): BN batch stats over the true M columns
    # only (padded columns excluded), centered variance, then affine + PReLU.
    yv = y[:, :M].astype(jnp.float32)                                 # (Cout, M)
    mean = jnp.mean(yv, axis=1, keepdims=True)
    var = jnp.mean(jnp.square(yv - mean), axis=1, keepdims=True)      # biased variance
    inv = lax.rsqrt(var + EPS)
    scale = gamma.reshape(cout, 1) * inv
    shift = beta.reshape(cout, 1) - mean * scale
    z = yv * scale + shift
    a = jnp.asarray(alpha, jnp.float32).reshape(-1, 1)                # PReLU (1 param)
    out = jnp.where(z >= 0, z, a * z)
    out = out.reshape(cout, N, Ho2, Wo2)
    return jnp.transpose(out, (1, 0, 2, 3))                           # -> NCHW


# ----------------------------------------------------------------------------
# Parameter init (PyTorch defaults + the module's xavier_normal_(gain=2.0) init)
# ----------------------------------------------------------------------------
def init_conv_pool_prelu_params(key, in_ch, out_ch, ksize):
    kw, kb = jax.random.split(key)
    fan_in = in_ch * ksize * ksize
    fan_out = out_ch * ksize * ksize
    std = 2.0 * np.sqrt(2.0 / (fan_in + fan_out))                     # xavier_normal_, gain=2.0
    w = std * jax.random.normal(kw, (ksize, ksize, in_ch, out_ch), jnp.float32)
    bound = 1.0 / np.sqrt(fan_in)
    b = jax.random.uniform(kb, (out_ch,), jnp.float32, -bound, bound) # Conv2d default bias
    gamma = jnp.ones((out_ch,), jnp.float32)                          # BatchNorm2d defaults
    beta = jnp.zeros((out_ch,), jnp.float32)
    alpha = jnp.full((1,), 0.25, jnp.float32)                         # nn.PReLU() default
    return (w, b, gamma, beta, alpha)


# ----------------------------------------------------------------------------
# Pure-XLA reference (loose numerical check; kernel uses bf16 matmul + bf16 y)
# ----------------------------------------------------------------------------
def _reference_forward(x_nchw, params, padding):
    w, b, gamma, beta, alpha = params
    y = lax.conv_general_dilated(
        x_nchw, w, window_strides=(1, 1),
        padding=[(padding, padding), (padding, padding)],
        dimension_numbers=("NCHW", "HWIO", "NCHW"))
    y = y + b.reshape(1, -1, 1, 1)
    y = lax.reduce_window(y, -jnp.inf, lax.max, (1, 1, 2, 2), (1, 1, 2, 2), "VALID")
    mean = jnp.mean(y, axis=(0, 2, 3), keepdims=True)
    var = jnp.mean((y - mean) ** 2, axis=(0, 2, 3), keepdims=True)
    y = (y - mean) * lax.rsqrt(var + EPS)
    y = gamma.reshape(1, -1, 1, 1) * y + beta.reshape(1, -1, 1, 1)
    return jnp.where(y >= 0, y, alpha.reshape(1, 1, 1, 1) * y)


if __name__ == "__main__":
    in_channels, out_channels, kernel_size, padding = 4, 8, 3, 1
    key = jax.random.PRNGKey(0)
    kparam, kx = jax.random.split(key)
    params = init_conv_pool_prelu_params(kparam, in_channels, out_channels, kernel_size)

    # NCHW input, same convention as the PyTorch module.
    x = jax.random.normal(kx, (2, in_channels, 32, 32), jnp.float32)

    fwd = jax.jit(lambda xx: conv_pool_prelu(xx, params, padding))
    out = jax.block_until_ready(fwd(x))

    assert out.shape == (2, out_channels, 16, 16), out.shape
    assert bool(jnp.all(jnp.isfinite(out)))

    ref = jax.block_until_ready(_reference_forward(x, params, padding))
    np.testing.assert_allclose(np.asarray(out), np.asarray(ref), atol=5e-2, rtol=5e-2)

    print("KERNEL_OK")
</pallas_src>

<mosaic_0001>
module attributes {stable_mosaic.version = 11 : i64} {
  func.func @_conv_pool_kernel(%arg0: i32, %arg1: memref<64x128xbf16, #tpu.memory_space<vmem>>, %arg2: memref<32x64xbf16, #tpu.memory_space<vmem>>, %arg3: memref<8x1xf32, #tpu.memory_space<vmem>>, %arg4: memref<8x128xbf16, #tpu.memory_space<vmem>>) attributes {dimension_semantics = [#tpu.dimension_semantics<parallel>], iteration_bounds = array<i64: 4>, scalar_prefetch = 0 : i64, scratch_operands = 0 : i64, tpu.core_type = #tpu.core_type<tc>, window_params = [{transform_indices = @transform_0, window_bounds = array<i64: 64, 128>}, {pipeline_mode = #tpu.pipeline_mode<synchronous>, transform_indices = @transform_1, window_bounds = array<i64: 32, 64>}, {pipeline_mode = #tpu.pipeline_mode<synchronous>, transform_indices = @transform_2, window_bounds = array<i64: 8, 1>}, {transform_indices = @transform_3, window_bounds = array<i64: 8, 128>}]} {
    %c0 = arith.constant 0 : index
    %c0_0 = arith.constant 0 : index
    %0 = vector.load %arg2[%c0, %c0_0] : memref<32x64xbf16, #tpu.memory_space<vmem>>, vector<32x64xbf16>
    %c0_1 = arith.constant 0 : index
    %c0_2 = arith.constant 0 : index
    %1 = vector.load %arg1[%c0_1, %c0_2] : memref<64x128xbf16, #tpu.memory_space<vmem>>, vector<64x128xbf16>
    %cst = arith.constant dense<0.000000e+00> : vector<32x128xf32>
    %2 = tpu.matmul %0, %1, %cst {dimension_numbers = #tpu.dot_dimension_numbers<[1], [0], [0], [1], [0, 0, 1, 1], [], []>} : vector<32x64xbf16>, vector<64x128xbf16>, vector<32x128xf32> -> vector<32x128xf32>
    %3 = vector.extract_strided_slice %2 {offsets = [0, 0], sizes = [8, 128], strides = [1, 1]} : vector<32x128xf32> to vector<8x128xf32>
    %4 = vector.extract_strided_slice %2 {offsets = [8, 0], sizes = [8, 128], strides = [1, 1]} : vector<32x128xf32> to vector<8x128xf32>
    %5 = vector.extract_strided_slice %2 {offsets = [16, 0], sizes = [8, 128], strides = [1, 1]} : vector<32x128xf32> to vector<8x128xf32>
    %6 = vector.extract_strided_slice %2 {offsets = [24, 0], sizes = [8, 128], strides = [1, 1]} : vector<32x128xf32> to vector<8x128xf32>
    %7 = arith.maximumf %3, %4 : vector<8x128xf32>
    %8 = arith.maximumf %5, %6 : vector<8x128xf32>
    %9 = arith.maximumf %7, %8 : vector<8x128xf32>
    %c0_3 = arith.constant 0 : index
    %c0_4 = arith.constant 0 : index
    %10 = vector.load %arg3[%c0_3, %c0_4] : memref<8x1xf32, #tpu.memory_space<vmem>>, vector<8x1xf32>
    %11 = vector.broadcast %10 : vector<8x1xf32> to vector<8x128xf32>
    %12 = arith.addf %9, %11 : vector<8x128xf32>
    %13 = arith.truncf %12 : vector<8x128xf32> to vector<8x128xbf16>
    %c0_5 = arith.constant 0 : index
    %c0_6 = arith.constant 0 : index
    %14 = vector.load %arg4[%c0_5, %c0_6] : memref<8x128xbf16, #tpu.memory_space<vmem>>, vector<8x128xbf16>
    tpu.vector_store %arg4[%c0_5, %c0_6], %13 {strides = array<i32>} : memref<8x128xbf16, #tpu.memory_space<vmem>>, vector<8x128xbf16>,
    return
  }
  func.func @transform_0(%arg0: i32) -> (i32, i32) {
    %c0_i32 = arith.constant 0 : i32
    %c0_i32_0 = arith.constant 0 : i32
    return %c0_i32, %arg0 : i32, i32
  }
  func.func @transform_1(%arg0: i32) -> (i32, i32) {
    %c0_i32 = arith.constant 0 : i32
    %c0_i32_0 = arith.constant 0 : i32
    %c0_i32_1 = arith.constant 0 : i32
    return %c0_i32, %c0_i32_0 : i32, i32
  }
  func.func @transform_2(%arg0: i32) -> (i32, i32) {
    %c0_i32 = arith.constant 0 : i32
    %c0_i32_0 = arith.constant 0 : i32
    %c0_i32_1 = arith.constant 0 : i32
    return %c0_i32, %c0_i32_0 : i32, i32
  }
  func.func @transform_3(%arg0: i32) -> (i32, i32) {
    %c0_i32 = arith.constant 0 : i32
    %c0_i32_0 = arith.constant 0 : i32
    return %c0_i32, %arg0 : i32, i32
  }
}

</mosaic_0001>

<llo_original>
// kernel: _lambda_.1
$region0: #{_lambda_.1}
  #allocation0 [shape = 'u32[]', space=smem, size = 0x4, offset = 0x4, fixed_abs, tag = 'smem constant byte address 0x4 - core index']
  #allocation1 [shape = 'u32[144,128]{1,0:T(1,128)}', space=vmem, size = 0x12000, scoped, tag = 'internal scratch']
  %s0 = inlined_call_operand.vmem [shape: bf16[64,512], index: 0, kind: input, shape index: {}]
  %s1 = inlined_call_operand.vmem [shape: bf16[32,64], index: 1, kind: input, shape index: {}]
  %s2 = inlined_call_operand.vmem [shape: f32[8,1], index: 2, kind: input, shape index: {}]
  %s3 = inlined_call_operand.vmem [shape: bf16[8,512], index: 3, kind: output, shape index: {}]
  %s4 = sld [smem:[#allocation0]]
  $region86: #{_lambda_.1} parent=0
    _
  %s6 = ssub.s32 1, %s4
  %s7 = scalar_select 0, %s6, %s4
  $region1: #{_lambda_.1} parent=0
    #allocation2 [shape = 'u8[32768]{0}', space=vmem, size = 0x8000, scoped, tag = 'input window, operand 0']
    loop: start=0, step=1, limit=6
    $region2: #{_lambda_.1} parent=1 // loop_pre_header
      _
    $region3: #{_lambda_.1} parent=1 // loop_header
      %s9 = sphi 0, %s13
      %p10 = scmp.ge.s32.totalorder %s9, 6
      %s19 = sphi 0, %s21
      %s22 = sphi 0, %s19
      %s23 = sphi 0, %s22
      %s39 = sphi 0, %s23
      %s43 = sphi 0, %s43
      %s45 = sphi 0, %s43
      %s46 = sphi 0, %s45
      %s60 = sphi 0, %s46
      %s64 = sphi 0, %s64
      %s66 = sphi 0, %s64
      %s67 = sphi 0, %s66
      %s81 = sphi 0, %s67
      %s87 = sphi 0, %s89
      %s90 = sphi 0, %s87
      %s91 = sphi 0, %s90
      %s107 = sphi 0, %s91
    $region4: #{_lambda_.1} parent=1 // loop_header_branch
      %12 = sbr.rel (%p10) target = $region8
    $region5: #{_lambda_.1} parent=1 // loop_body
      %s14 = ssub.s32 %s9, 1
      %s15 = ssub.s32 %s9, 2
      %s16 = sadd.s32 %s9, 1
      %s17 = ssub.s32 %s9, %s16
      %p18 = scmp.eq.s32.totalorder %s17, 0
      %s20 = sadd.s32 %s19, 1
      %s21 = scalar_select %p18, %s19, %s20
      %p24 = pneg %p18
      %p25 = scmp.eq.s32.totalorder %s9, 3
      %p26 = por %p24, %p25
      %p27 = scmp.ne.s32.totalorder %s19, %s22
      %p28 = scmp.eq.s32.totalorder %s9, 0
      %p29 = por %p27, %p28
      %p30 = scmp.ne.s32.totalorder %s19, %s22
      %p31 = scmp.eq.s32.totalorder %s14, 3
      %p32 = por %p30, %p31
      %p33 = scmp.ne.s32.totalorder %s22, %s23
      %p34 = scmp.eq.s32.totalorder %s14, 0
      %p35 = por %p33, %p34
      %p36 = scmp.ne.s32.totalorder %s22, %s23
      %p37 = scmp.eq.s32.totalorder %s15, 3
      %p38 = por %p36, %p37
      %p40 = scmp.ne.s32.totalorder %s23, %s39
      %p41 = scmp.eq.s32.totalorder %s15, 0
      %p42 = por %p40, %p41
      %s44 = sadd.s32 %s43, 1
      %p47 = scmp.eq.s32.totalorder %s9, 3
      %p48 = scmp.ne.s32.totalorder %s43, %s45
      %p49 = scmp.eq.s32.totalorder %s9, 0
      %p50 = por %p48, %p49
      %p51 = scmp.ne.s32.totalorder %s43, %s45
      %p52 = scmp.eq.s32.totalorder %s14, 3
      %p53 = por %p51, %p52
      %p54 = scmp.ne.s32.totalorder %s45, %s46
      %p55 = scmp.eq.s32.totalorder %s14, 0
      %p56 = por %p54, %p55
      %p57 = scmp.ne.s32.totalorder %s45, %s46
      %p58 = scmp.eq.s32.totalorder %s15, 3
      %p59 = por %p57, %p58
      %p61 = scmp.ne.s32.totalorder %s46, %s60
      %p62 = scmp.eq.s32.totalorder %s15, 0
      %p63 = por %p61, %p62
      %s65 = sadd.s32 %s64, 1
      %p68 = scmp.eq.s32.totalorder %s9, 3
      %p69 = scmp.ne.s32.totalorder %s64, %s66
      %p70 = scmp.eq.s32.totalorder %s9, 0
      %p71 = por %p69, %p70
      %p72 = scmp.ne.s32.totalorder %s64, %s66
      %p73 = scmp.eq.s32.totalorder %s14, 3
      %p74 = por %p72, %p73
      %p75 = scmp.ne.s32.totalorder %s66, %s67
      %p76 = scmp.eq.s32.totalorder %s14, 0
      %p77 = por %p75, %p76
      %p78 = scmp.ne.s32.totalorder %s66, %s67
      %p79 = scmp.eq.s32.totalorder %s15, 3
      %p80 = por %p78, %p79
      %p82 = scmp.ne.s32.totalorder %s67, %s81
      %p83 = scmp.eq.s32.totalorder %s15, 0
      %p84 = por %p82, %p83
      %s85 = ssub.s32 %s9, %s16
      %p86 = scmp.eq.s32.totalorder %s85, 0
      %s88 = sadd.s32 %s87, 1
      %s89 = scalar_select %p86, %s87, %s88
      %p92 = pneg %p86
      %p93 = scmp.eq.s32.totalorder %s9, 3
      %p94 = por %p92, %p93
      %p95 = scmp.ne.s32.totalorder %s87, %s90
      %p96 = scmp.eq.s32.totalorder %s9, 0
      %p97 = por %p95, %p96
      %p98 = scmp.ne.s32.totalorder %s87, %s90
      %p99 = scmp.eq.s32.totalorder %s14, 3
      %p100 = por %p98, %p99
      %p101 = scmp.ne.s32.totalorder %s90, %s91
      %p102 = scmp.eq.s32.totalorder %s14, 0
      %p103 = por %p101, %p102
      %p104 = scmp.ne.s32.totalorder %s90, %s91
      %p105 = scmp.eq.s32.totalorder %s15, 3
      %p106 = por %p104, %p105
      %p108 = scmp.ne.s32.totalorder %s91, %s107
      %p109 = scmp.eq.s32.totalorder %s15, 0
      %p110 = por %p108, %p109
      %p111 = scmp.le.s32.totalorder 1, %s9
      %p112 = scmp.lt.s32.totalorder %s9, 5
      %p113 = pnand %p111, %p112
      %p114 = pneg %p113
      // Predicated region
      $region9: #{_lambda_.1} parent=5 // pred_check
        _
      $region10: #{_lambda_.1} parent=5 // pred_check_branch
        %116 = sbr.rel (%p113) target = $region12
      $region11: #{_lambda_.1} parent=5 // pred_region
        %s117 = ssub.s32 %s9, 1
        // Predicated region
        $region13: #{_lambda_.1} parent=11 // pred_check
          %p118 = pneg %p56
        $region14: #{_lambda_.1} parent=11 // pred_check_branch
          %120 = sbr.rel (%p118) target = $region16
        $region15: #{_lambda_.1} parent=11 // pred_region
          _
        $region16: #{_lambda_.1} parent=11 // pred_fallthru
          _
        // Predicated region
        $region17: #{_lambda_.1} parent=11 // pred_check
          %p121 = pneg %p77
        $region18: #{_lambda_.1} parent=11 // pred_check_branch
          %123 = sbr.rel (%p121) target = $region20
        $region19: #{_lambda_.1} parent=11 // pred_region
          _
        $region20: #{_lambda_.1} parent=11 // pred_fallthru
          _
      $region12: #{_lambda_.1} parent=5 // pred_fallthru
        _
      %p124 = scmp.lt.s32.totalorder %s9, 4
      // Predicated region
      $region21: #{_lambda_.1} parent=5 // pred_check
        %p125 = pneg %p124
      $region22: #{_lambda_.1} parent=5 // pred_check_branch
        %127 = sbr.rel (%p125) target = $region24
      $region23: #{_lambda_.1} parent=5 // pred_region
        // Predicated region
        $region25: #{_lambda_.1} parent=23 // pred_check
          %p128 = pneg %p29
        $region26: #{_lambda_.1} parent=23 // pred_check_branch
          %130 = sbr.rel (%p128) target = $region28
        $region27: #{_lambda_.1} parent=23 // pred_region
          %s131 = sand.u32 %s19, 1
          %s132 = sand.u32 %s19, 1
          %s133 = smul.addr %s132, 32
          %s134 = scalar_lea.vmem [#allocation2], %s133
          %s135 = smul.addr %s9, 4
          %s136 = scalar_lea.vmem %s0, %s135
          // Predicated region
          $region29: #{_lambda_.1} parent=27 // pred_check
            _
          $region30: #{_lambda_.1} parent=27 // pred_check_branch
            %138 = sbr.rel (0) target = $region32
          $region31: #{_lambda_.1} parent=27 // pred_region
            // Predicated region
            $region33: #{_lambda_.1} parent=31 // pred_check
              _
            $region34: #{_lambda_.1} parent=31 // pred_check_branch
              %140 = sbr.rel target = $region36
            $region35: #{_lambda_.1} parent=31 // pred_region
              // Predicated region
              $region48: #{_lambda_.1} parent=35 // pred_check
                _
              $region49: #{_lambda_.1} parent=35 // pred_check_branch
                %170 = sbr.rel (0) target = $region51
              $region50: #{_lambda_.1} parent=35 // pred_region
                loop: start=0, step=1, limit=1
                $region52: #{_lambda_.1} parent=50 // loop_pre_header
                  _
                $region53: #{_lambda_.1} parent=50 // loop_header
                  %s172 = sphi 0, %s176
                  %p173 = scmp.ge.s32.totalorder %s172, 1
                  %s177 = sphi %s136, %s136
                  %s178 = sphi %s134, %s134
                $region54: #{_lambda_.1} parent=50 // loop_header_branch
                  %175 = sbr.rel (%p173) target = $region58
                $region55: #{_lambda_.1} parent=50 // loop_body
                  _
                $region56: #{_lambda_.1} parent=50 // loop_footer
                  %s176 = sadd.s32 1, %s172
                $region57: #{_lambda_.1} parent=50 // loop_footer_branch
                  %171 = sbr.rel target = $region53
                $region58: #{_lambda_.1} parent=50 // loop_exit
                  _
                %s180 = ssub.s32 16, 1
                loop: start=0, step=1, limit=1
                $region59: #{_lambda_.1} parent=50 // loop_pre_header
                  _
                $region60: #{_lambda_.1} parent=50 // loop_header
                  %s182 = sphi 0, %s186
                  %p183 = scmp.ge.s32.totalorder %s182, 1
                  %s187 = sphi %s136, %s136
                  %s188 = sphi %s134, %s134
                $region61: #{_lambda_.1} parent=50 // loop_header_branch
                  %185 = sbr.rel (%p183) target = $region65
                $region62: #{_lambda_.1} parent=50 // loop_body
                  %v189 = vld [vmem:[%s187] sm:%s180]
                  %190 = vst [vmem:[%s188] sm:%s180] %v189
                  %v191 = vld [vmem:[%s187 + $0x10] sm:%s180]
                  %192 = vst [vmem:[%s188 + $0x4] sm:%s180] %v191
                  %v193 = vld [vmem:[%s187 + $0x20] sm:%s180]
                  %194 = vst [vmem:[%s188 + $0x8] sm:%s180] %v193
                  %v195 = vld [vmem:[%s187 + $0x30] sm:%s180]
                  %196 = vst [vmem:[%s188 + $0xc] sm:%s180] %v195
                  %v197 = vld [vmem:[%s187 + $0x40] sm:%s180]
                  %198 = vst [vmem:[%s188 + $0x10] sm:%s180] %v197
                  %v199 = vld [vmem:[%s187 + $0x50] sm:%s180]
                  %200 = vst [vmem:[%s188 + $0x14] sm:%s180] %v199
                  %v201 = vld [vmem:[%s187 + $0x60] sm:%s180]
                  %202 = vst [vmem:[%s188 + $0x18] sm:%s180] %v201
                  %v203 = vld [vmem:[%s187 + $0x70] sm:%s180]
                  %204 = vst [vmem:[%s188 + $0x1c] sm:%s180] %v203
                $region63: #{_lambda_.1} parent=50 // loop_footer
                  %s186 = sadd.s32 1, %s182
                $region64: #{_lambda_.1} parent=50 // loop_footer_branch
                  %181 = sbr.rel target = $region60
                $region65: #{_lambda_.1} parent=50 // loop_exit
                  _
              $region51: #{_lambda_.1} parent=35 // pred_fallthru
                _
            $region36: #{_lambda_.1} parent=31 // pred_fallthru
              _
            // Predicated region
            $region37: #{_lambda_.1} parent=31 // pred_check
              _
            $region38: #{_lambda_.1} parent=31 // pred_check_branch
              %142 = sbr.rel (0) target = $region40
            $region39: #{_lambda_.1} parent=31 // pred_region
              %s144 = ssub.s32 16, 1
              loop: start=0, step=1, limit=1
              $region41: #{_lambda_.1} parent=39 // loop_pre_header
                _
              $region42: #{_lambda_.1} parent=39 // loop_header
                %s146 = sphi 0, %s150
                %p147 = scmp.ge.s32.totalorder %s146, 1
                %s151 = sphi %s136, %s136
                %s152 = sphi %s134, %s134
              $region43: #{_lambda_.1} parent=39 // loop_header_branch
                %149 = sbr.rel (%p147) target = $region47
              $region44: #{_lambda_.1} parent=39 // loop_body
                %v153 = vld [vmem:[%s151] sm:%s144]
                %154 = vst [vmem:[%s152] sm:%s144] %v153
                %v155 = vld [vmem:[%s151 + $0x10] sm:%s144]
                %156 = vst [vmem:[%s152 + $0x4] sm:%s144] %v155
                %v157 = vld [vmem:[%s151 + $0x20] sm:%s144]
                %158 = vst [vmem:[%s152 + $0x8] sm:%s144] %v157
                %v159 = vld [vmem:[%s151 + $0x30] sm:%s144]
                %160 = vst [vmem:[%s152 + $0xc] sm:%s144] %v159
                %v161 = vld [vmem:[%s151 + $0x40] sm:%s144]
                %162 = vst [vmem:[%s152 + $0x10] sm:%s144] %v161
                %v163 = vld [vmem:[%s151 + $0x50] sm:%s144]
                %164 = vst [vmem:[%s152 + $0x14] sm:%s144] %v163
                %v165 = vld [vmem:[%s151 + $0x60] sm:%s144]
                %166 = vst [vmem:[%s152 + $0x18] sm:%s144] %v165
                %v167 = vld [vmem:[%s151 + $0x70] sm:%s144]
                %168 = vst [vmem:[%s152 + $0x1c] sm:%s144] %v167
              $region45: #{_lambda_.1} parent=39 // loop_footer
                %s150 = sadd.s32 1, %s146
              $region46: #{_lambda_.1} parent=39 // loop_footer_branch
                %145 = sbr.rel target = $region42
              $region47: #{_lambda_.1} parent=39 // loop_exit
                _
            $region40: #{_lambda_.1} parent=31 // pred_fallthru
              _
          $region32: #{_lambda_.1} parent=27 // pred_fallthru
            _
          %205 = vnop
        $region28: #{_lambda_.1} parent=23 // pred_fallthru
          _
      $region24: #{_lambda_.1} parent=5 // pred_fallthru
        _
      %p206 = scmp.le.s32.totalorder 1, %s9
      %p207 = scmp.lt.s32.totalorder %s9, 5
      %p208 = pnand %p206, %p207
      %p209 = pneg %p208
      // Predicated region
      $region66: #{_lambda_.1} parent=5 // pred_check
        _
      $region67: #{_lambda_.1} parent=5 // pred_check_branch
        %211 = sbr.rel (%p208) target = $region69
      $region68: #{_lambda_.1} parent=5 // pred_region
        %s212 = ssub.s32 %s9, 1
        %s213 = sand.u32 %s22, 1
        %s214 = sand.u32 %s22, 1
        %s215 = smul.addr %s214, 32
        %s216 = scalar_lea.vmem [#allocation2], %s215
        // Predicated region
        $region70: #{_lambda_.1} parent=68 // pred_check
          %p217 = pneg %p35
        $region71: #{_lambda_.1} parent=68 // pred_check_branch
          %219 = sbr.rel (%p217) target = $region73
        $region72: #{_lambda_.1} parent=68 // pred_region
          _
        $region73: #{_lambda_.1} parent=68 // pred_fallthru
          _
        %s220 = sand.u32 %s22, 1
        %s221 = sand.u32 %s22, 1
        %s222 = smul.addr %s221, 32
        %s223 = scalar_lea.vmem [#allocation2], %s222
        %p224 = pneg %p35
        %p225 = pneg %p32
        %p226 = pneg %p56
        %p227 = pneg %p53
        %p228 = pneg %p77
        %p229 = pneg %p74
        %p230 = pneg %p103
        %p231 = pneg %p100
        %p232 = scmp.lt.s32.totalorder %s14, 3
        %s233 = scalar_select %p232, %s14, 3
        %s234 = smul.addr %s233, 4
        %s235 = scalar_lea.vmem %s3, %s234
        %p236 = scmp.lt.s32.totalorder %s14, 3
        %s237 = scalar_select %p236, %s14, 3
        %s238 = smul.addr %s237, 4
        %s239 = scalar_lea.vmem %s3, %s238
        %v241 = vld [vmem:[%s1] sm:$0xf]
        %v242 = vld [vmem:[%s1 + $0x4] sm:$0xf]
        %v243 = vld [vmem:[%s1 + $0x8] sm:$0xf]
        %v244 = vld [vmem:[%s1 + $0xc] sm:$0xf]
        %v245 = vld [vmem:[%s216] sm:$0xf]
        %v246 = vld [vmem:[%s216 + $0x4] sm:$0xf]
        %v247 = vld [vmem:[%s216 + $0x8] sm:$0xf]
        %v248 = vld [vmem:[%s216 + $0xc] sm:$0xf]
        %v249 = vld [vmem:[%s216 + $0x10] sm:$0xf]
        %v250 = vld [vmem:[%s216 + $0x14] sm:$0xf]
        %v251 = vld [vmem:[%s216 + $0x18] sm:$0xf]
        %v252 = vld [vmem:[%s216 + $0x1c] sm:$0xf]
        %v257 = vunpack.c.l.b16 %v241
        %v258 = vunpack.c.l.b16 %v242
        %v259 = vunpack.c.l.b16 %v243
        %v260 = vunpack.c.l.b16 %v244
        %v261 = vpack.c.b16 %v258, %v257
        %v262 = vpack.c.b16 %v260, %v259
        %v271 = vunpack.c.l.b16 %v245
        %v272 = vunpack.c.l.b16 %v246
        %v273 = vunpack.c.l.b16 %v247
        %v274 = vunpack.c.l.b16 %v248
        %v275 = vunpack.c.l.b16 %v249
        %v276 = vunpack.c.l.b16 %v250
        %v277 = vunpack.c.l.b16 %v251
        %v278 = vunpack.c.l.b16 %v252
        %v279 = vpack.c.b16 %v272, %v271
        %v280 = vpack.c.b16 %v274, %v273
        %v281 = vpack.c.b16 %v276, %v275
        %v282 = vpack.c.b16 %v278, %v277
        %vm287 = vcmask 523264
        %v289 = vsel %vm287, %v261, 0
        %v292 = vsel %vm287, %v262, 0
        %294 = vmatprep.subr.bf16.mxu0 0
        %295 = vmatpush1.bf16.msra.mxu0 0
        %296 = vmatprep.subr.bf16.mxu0 0
        %297 = vmatpush1.bf16.msra.mxu0 0
        %298 = vmatprep.subr.bf16.mxu0 0
        %299 = vmatpush1.bf16.msra.mxu0 0
        %300 = vmatprep.subr.bf16.mxu0 0
        %301 = vmatpush1.bf16.msra.mxu0 0
        %302 = vmatprep.subr.bf16.mxu0 0
        %303 = vmatpush1.bf16.msra.mxu0 %v282
        %304 = vmatprep.subr.bf16.mxu0 0
        %305 = vmatpush1.bf16.msra.mxu0 %v281
        %306 = vmatprep.subr.bf16.mxu0 0
        %307 = vmatpush1.bf16.msra.mxu0 %v280
        %308 = vmatprep.subr.bf16.mxu0 0
        %309 = vmatpush1.bf16.msra.mxu0 %v279
        %310 = vmatprep.subr.bf16.mxu0 0
        %311 = vmatpush2.bf16.msra.mxu0 0
        %312 = vmatprep.subr.bf16.mxu0 0
        %313 = vmatpush2.bf16.msra.mxu0 0
        %314 = vmatprep.subr.bf16.mxu0 0
        %315 = vmatpush2.bf16.msra.mxu0 0
        %316 = vmatprep.subr.bf16.mxu0 0
        %317 = vmatpush2.bf16.msra.mxu0 0
        %318 = vmatprep.subr.bf16.mxu0 0
        %319 = vmatpush2.bf16.msra.mxu0 0
        %320 = vmatprep.subr.bf16.mxu0 0
        %321 = vmatpush2.bf16.msra.mxu0 0
        %322 = vmatprep.subr.bf16.mxu0 0
        %323 = vmatpush2.bf16.msra.mxu0 0
        %324 = vmatprep.subr.bf16.mxu0 0
        %325 = vmatpush2.bf16.msra.mxu0 0
        %326 = vmatprep.mubr.bf16.mxu0 0
        %327 = vmatmul.mubr.bf16.gmra.mxu0 %v289
        %v328 = vpop.f32.mrf.mxu0
        %v329 = vadd.f32 0.0, %v328
        %v330 = vpop.f32.mrf.mxu0
        %v331 = vpop.f32.mrf.mxu0
        %v332 = vadd.f32 0.0, %v331
        %v333 = vpop.f32.mrf.mxu0
        %334 = vmatprep.mubr.bf16.mxu0 0
        %335 = vmatmul.mubr.bf16.gmra.mxu0 %v292
        %v336 = vpop.f32.mrf.mxu0
        %v337 = vadd.f32 0.0, %v336
        %v338 = vpop.f32.mrf.mxu0
        %v339 = vpop.f32.mrf.mxu0
        %v340 = vadd.f32 0.0, %v339
        %v341 = vpop.f32.mrf.mxu0
        %342 = vdwg.mxu0
        %v343 = vmax.f32 %v329, %v332
        %v344 = vmax.f32 %v337, %v340
        %v345 = vmax.f32 %v343, %v344
        %v346 = vld [vmem:[%s2] sm:$0xff]
        %348 = vset.pattern.permute.xlu0 0
        %349 = vperm.xlu0 %348, %v346
        %v350 = vpop.permute.xlu0 %349
        %v352 = vadd.f32 %v345, %v350
        %v353 = vpack.c.bf16 %v352, %v352
        %354 = vst [vmem:[%s239] sm:$0xf] %v353
        %p355 = scmp.lt.s32.totalorder %s14, 3
        %s356 = scalar_select %p355, %s14, 3
        %s357 = smul.addr %s356, 4
        %s358 = scalar_lea.vmem %s3, %s357
        // Predicated region
        $region74: #{_lambda_.1} parent=68 // pred_check
          %p359 = pneg %p100
        $region75: #{_lambda_.1} parent=68 // pred_check_branch
          %361 = sbr.rel (%p359) target = $region77
        $region76: #{_lambda_.1} parent=68 // pred_region
          _
        $region77: #{_lambda_.1} parent=68 // pred_fallthru
          _
      $region69: #{_lambda_.1} parent=5 // pred_fallthru
        _
      %p362 = scmp.le.s32.totalorder 2, %s9
      // Predicated region
      $region78: #{_lambda_.1} parent=5 // pred_check
        %p363 = pneg %p362
      $region79: #{_lambda_.1} parent=5 // pred_check_branch
        %365 = sbr.rel (%p363) target = $region81
      $region80: #{_lambda_.1} parent=5 // pred_region
        %s366 = ssub.s32 %s9, 2
        // Predicated region
        $region82: #{_lambda_.1} parent=80 // pred_check
          %p367 = pneg %p106
        $region83: #{_lambda_.1} parent=80 // pred_check_branch
          %369 = sbr.rel (%p367) target = $region85
        $region84: #{_lambda_.1} parent=80 // pred_region
          %p370 = scmp.lt.s32.totalorder %s15, 3
          %s371 = scalar_select %p370, %s15, 3
          %s372 = smul.addr %s371, 4
          %s373 = scalar_lea.vmem %s3, %s372
        $region85: #{_lambda_.1} parent=80 // pred_fallthru
          _
      $region81: #{_lambda_.1} parent=5 // pred_fallthru
        _
    $region6: #{_lambda_.1} parent=1 // loop_footer
      %s13 = sadd.s32 1, %s9
    $region7: #{_lambda_.1} parent=1 // loop_footer_branch
      %8 = sbr.rel target = $region3
    $region8: #{_lambda_.1} parent=1 // loop_exit
      _

</llo_original>
